<compile_context>
chip_gen: v6e
topology: v6e:2x2x1
jax: 0.10.0
libtpu: 0.0.40
codegen_flags: <defaults>
</compile_context>

<pallas_src>
import math

import numpy as np

import jax
import jax.numpy as jnp
from jax.experimental import pallas as pl
from jax.experimental.pallas import tpu as pltpu

BN_EPS = 1e-5


# ------------------------------ fused kernel --------------------------------

def _make_fused_head_kernel(layer_cfgs, batch, num_classes):
    """Fused whole-head kernel.  layer_cfgs: ((H_in, W_in, Cin, Cout, has_bn),...)."""
    n_layers = len(layer_cfgs)
    del num_classes  # shape comes from out_ref

    def kernel(*refs):
        # refs = [x2d, (cm, aux) per layer ..., wpf, fcb, out, scratch...]
        x_ref = refs[0]
        lrefs = [(refs[1 + 2 * i], refs[2 + 2 * i]) for i in range(n_layers)]
        wpf_ref = refs[1 + 2 * n_layers]
        fcb_ref = refs[2 + 2 * n_layers]
        out_ref = refs[3 + 2 * n_layers]
        scratches = refs[4 + 2 * n_layers:]

        src = x_ref
        h = None
        for li, (hin, win, cin, cout, has_bn) in enumerate(layer_cfgs):
            cm_ref, aux_ref = lrefs[li]
            ho = hin // 2
            rows = batch * ho
            w1 = win * cin

            # Stride-2 sublane gathers of the kh=1 / kh=2 tap rows, directly
            # from the (VMEM) ref -- vld slot work, no MXU, no dense selector.
            kh1 = src[pl.ds(0, rows, stride=2), :]       # rows 2i   per batch
            kh2 = src[pl.ds(1, rows, stride=2), :]       # rows 2i+1 per batch
            # kh=0 tap needs rows clamp(2i-1, 0) per batch block: that is kh2
            # shifted down one output row, with each block's first row
            # replicate-clamped to row 0 of the block (== kh1's first row).
            shifted = pltpu.roll(kh2, shift=1, axis=0)   # shifted[r] = kh2[r-1]
            rid = jax.lax.broadcasted_iota(jnp.int32, (rows, w1), 0)
            kh0 = jnp.where(rid % ho == 0, kh1, shifted)

            # One K-stacked MXU matmul per layer (K = 3*W*Cin), bf16 operands,
            # f32 accumulate.  CM folds {kw-tap column selection + replicate
            # clamp + 3x3 conv weights}.
            xg = jnp.concatenate([kh0, kh1, kh2], axis=1).astype(jnp.bfloat16)
            y = jnp.dot(xg, cm_ref[...], preferred_element_type=jnp.float32)
            y = y + aux_ref[0:1, :]                      # conv bias (per column)
            if has_bn:
                # ConvBlock: out = relu(BN(y)) + y   (BN pre-folded to scale/shift)
                bn = y * aux_ref[1:2, :] + aux_ref[2:3, :]
                h = jnp.maximum(bn, 0.0) + y
            else:
                # Final ConvBlock: `x += y` with x aliasing y -> out = 2*conv(x)
                h = y + y
            if li + 1 < n_layers:
                scratches[li][...] = h                   # next layer gathers from VMEM
                src = scratches[li]

        # AdaptiveAvgPool2d((1,1)) + Linear:
        #   mean over H = sublane reduction; mean over W folded into wpf.
        hin_last, win_last, _, c_last, _ = layer_cfgs[-1]
        ho, wo = hin_last // 2, win_last // 2
        pooled = jnp.mean(h.reshape(batch, ho, wo * c_last), axis=1)   # (B, Wo*C)
        logits = jnp.dot(pooled.astype(jnp.bfloat16), wpf_ref[...],
                         preferred_element_type=jnp.float32)
        # 6-wide output -> single masked store; acceptable for one write.
        out_ref[...] = logits + fcb_ref[...]

    return kernel


def forward(folded, x_nhwc):
    """Fused ProgressiveConvDecoder forward (the head ModelBase builds)."""
    B, H, W, C = x_nhwc.shape
    assert (B, H, W, C) == folded["in_shape"], (
        "fold_params baked in a different (batch, img_size, in_channels); "
        f"got {(B, H, W, C)}, folded for {folded['in_shape']} -- re-fold.")

    # rows = (b, h), cols = (w, c): a free row-major reshape of NHWC, no im2col.
    x2d = x_nhwc.reshape(B * H, W * C)

    operands = [x2d]
    for lyr in folded["layers"]:
        operands += [lyr["cm"], lyr["aux"]]
    operands += [folded["wpf"], folded["fcb"]]

    scratch_shapes = [pltpu.VMEM(s, jnp.float32) for s in folded["scratch_shapes"]]

    total_bytes = sum(int(np.prod(o.shape)) * o.dtype.itemsize for o in operands)
    total_bytes += sum(int(np.prod(s)) * 4 for s in folded["scratch_shapes"])
    # Whole-head-in-VMEM assumption; 16 MiB matches v5e's scoped default (the
    # tightest of v5e/v6e/v7x).  Tile the batch dim with a parallel grid (and
    # raise vmem_limit_bytes via pltpu.CompilerParams) before growing past it.
    assert total_bytes < 16 * 1024 * 1024, (
        "fused single-block kernel assumes the whole head fits in VMEM")

    vmem = pl.BlockSpec(memory_space=pltpu.MemorySpace.VMEM)
    kernel = _make_fused_head_kernel(folded["layer_cfgs"], B,
                                     folded["num_classes"])
    return pl.pallas_call(
        kernel,
        out_shape=jax.ShapeDtypeStruct((B, folded["num_classes"]), jnp.float32),
        in_specs=[vmem] * len(operands),
        out_specs=vmem,
        scratch_shapes=scratch_shapes,
    )(*operands)


# -------------------------- parameter init & folding ------------------------

def init_params(key, img_size=32, in_channels=2, num_classes=6):
    """PyTorch-default-style init for ProgressiveConvDecoder."""
    n_layers = int(math.log2(img_size // 16)) + 1
    kernels = [in_channels * 2 ** i for i in range(n_layers)]
    chans = list(zip(kernels[:-1], kernels[1:])) + [(kernels[-1], kernels[-1])]

    keys = jax.random.split(key, 2 * len(chans) + 2)
    layers = []
    for li, (cin, cout) in enumerate(chans):
        bound = 1.0 / math.sqrt(9 * cin)
        w = jax.random.uniform(keys[2 * li], (3, 3, cin, cout), jnp.float32,
                               -bound, bound)
        b = jax.random.uniform(keys[2 * li + 1], (cout,), jnp.float32,
                               -bound, bound)
        is_last = li == len(chans) - 1
        bn = None if is_last else dict(
            gamma=jnp.ones((cout,), jnp.float32),    # reset_parameters: weight=1
            beta=jnp.zeros((cout,), jnp.float32),    # bias=0
            mean=jnp.zeros((cout,), jnp.float32),    # running_mean=0
            var=jnp.ones((cout,), jnp.float32))      # running_var=1
        layers.append(dict(w=w, b=b, bn=bn))

    c_last = kernels[-1]
    bound = 1.0 / math.sqrt(c_last)
    fc_w = jax.random.uniform(keys[-2], (c_last, num_classes), jnp.float32,
                              -bound, bound)
    fc_b = jax.random.uniform(keys[-1], (num_classes,), jnp.float32,
                              -bound, bound)
    return dict(layers=layers, fc_w=fc_w, fc_b=fc_b)


def fold_params(params, batch, img_size, in_channels):
    """Constant-fold conv taps / replicate column padding / BN / W-pooling into
    small dense operators the fused kernel consumes as matmul / bias operands."""
    H = W = img_size
    cin = in_channels
    layers, layer_cfgs, scratch_shapes = [], [], []
    for li, lyr in enumerate(params["layers"]):
        w = np.asarray(lyr["w"], np.float32)           # (3, 3, cin, cout)
        cout = w.shape[-1]
        Ho, Wo = H // 2, W // 2

        # CM: K-stacked column operator.  Row-block kh folds {kw-tap column
        # selection with replicate clamp} x {conv weights}, summed over kw.
        cm = np.zeros((3, W * cin, Wo * cout), np.float32)
        for kh in range(3):
            for kw in range(3):
                for j in range(Wo):
                    ws = min(max(2 * j + kw - 1, 0), W - 1)
                    cm[kh, ws * cin:(ws + 1) * cin,
                       j * cout:(j + 1) * cout] += w[kh, kw]
        cm = cm.reshape(3 * W * cin, Wo * cout)         # kh0 | kh1 | kh2 along K

        bias_row = np.tile(np.asarray(lyr["b"], np.float32), Wo)   # (Wo*cout,)
        if lyr["bn"] is not None:
            g = np.asarray(lyr["bn"]["gamma"], np.float32)
            be = np.asarray(lyr["bn"]["beta"], np.float32)
            mu = np.asarray(lyr["bn"]["mean"], np.float32)
            var = np.asarray(lyr["bn"]["var"], np.float32)
            s = g / np.sqrt(var + BN_EPS)
            t = be - mu * s
            aux = np.stack([bias_row, np.tile(s, Wo), np.tile(t, Wo)])
            has_bn = True
        else:
            aux = bias_row[None, :]
            has_bn = False

        layers.append(dict(cm=jnp.asarray(cm, dtype=jnp.bfloat16),
                           aux=jnp.asarray(aux, dtype=jnp.float32)))
        layer_cfgs.append((H, W, cin, cout, has_bn))
        if li + 1 < len(params["layers"]):
            scratch_shapes.append((batch * Ho, Wo * cout))
        H, W, cin = Ho, Wo, cout

    # W-pooling folded into the FC weight: logits = mean_H(h) @ wpf + fc_b.
    fc_w = np.asarray(params["fc_w"], np.float32)       # (C_last, nc)
    nc = fc_w.shape[1]
    wpf = np.kron(np.ones((W, 1), np.float32), fc_w) / W        # (W*C_last, nc)
    fcb = np.asarray(params["fc_b"], np.float32)[None, :]       # (1, nc)
    return dict(layers=layers, layer_cfgs=tuple(layer_cfgs),
                scratch_shapes=tuple(scratch_shapes),
                wpf=jnp.asarray(wpf, dtype=jnp.bfloat16),
                fcb=jnp.asarray(fcb), num_classes=nc,
                in_shape=(batch, img_size, img_size, in_channels))


# ----------------------------- pure-JAX reference ----------------------------

def reference_forward(params, x_nhwc):
    h = x_nhwc
    for lyr in params["layers"]:
        hp = jnp.pad(h, ((0, 0), (1, 1), (1, 1), (0, 0)), mode="edge")
        y = jax.lax.conv_general_dilated(
            hp, lyr["w"], window_strides=(2, 2), padding="VALID",
            dimension_numbers=("NHWC", "HWIO", "NHWC"),
            precision=jax.lax.Precision.HIGHEST) + lyr["b"]
        if lyr["bn"] is not None:
            bn = lyr["bn"]
            xh = (y - bn["mean"]) / jnp.sqrt(bn["var"] + BN_EPS) \
                * bn["gamma"] + bn["beta"]
            h = jnp.maximum(xh, 0.0) + y
        else:
            h = y + y
    pooled = h.mean(axis=(1, 2))
    return pooled @ params["fc_w"] + params["fc_b"]


# ---------------------------------- main -------------------------------------

if __name__ == "__main__":
    key = jax.random.PRNGKey(0)
    kx, kp = jax.random.split(key)

    # PyTorch-convention input: (batch, channels, H, W) = (2, 2, 32, 32)
    # (build_sparam_head uses in_channels=2, num_classes=6; img_size=32 gives
    #  one BN ConvBlock + the final plain ConvBlock).
    B, C, H, W = 2, 2, 32, 32
    x_nchw = jax.random.normal(kx, (B, C, H, W), jnp.float32)
    x_nhwc = jnp.transpose(x_nchw, (0, 2, 3, 1))        # NCHW -> NHWC

    params = init_params(kp, img_size=H, in_channels=C, num_classes=6)
    folded = fold_params(params, batch=B, img_size=H, in_channels=C)

    logits = forward(folded, x_nhwc)
    jax.block_until_ready(logits)

    ref = reference_forward(params, x_nhwc)
    assert logits.shape == (B, 6), logits.shape
    assert bool(jnp.all(jnp.isfinite(logits)))
    # bf16 MXU operands (f32 accumulate) vs f32-HIGHEST reference.
    assert bool(jnp.allclose(logits, ref, rtol=2e-2, atol=2e-2)), (logits, ref)
    print("KERNEL_OK")
</pallas_src>

<mosaic_0001>
module attributes {stable_mosaic.version = 11 : i64} {
  func.func @kernel(%arg0: memref<64x64xf32, #tpu.memory_space<vmem>>, %arg1: memref<192x64xbf16, #tpu.memory_space<vmem>>, %arg2: memref<3x64xf32, #tpu.memory_space<vmem>>, %arg3: memref<192x32xbf16, #tpu.memory_space<vmem>>, %arg4: memref<1x32xf32, #tpu.memory_space<vmem>>, %arg5: memref<32x6xbf16, #tpu.memory_space<vmem>>, %arg6: memref<1x6xf32, #tpu.memory_space<vmem>>, %arg7: memref<2x6xf32, #tpu.memory_space<vmem>>, %arg8: memref<32x64xf32, #tpu.memory_space<vmem>>) attributes {dimension_semantics = [], scalar_prefetch = 0 : i64, scratch_operands = 1 : i64, tpu.core_type = #tpu.core_type<tc>} {
    %c0 = arith.constant 0 : index
    %c0_0 = arith.constant 0 : index
    %0 = tpu.strided_load %arg0[%c0, %c0_0] {strides = array<i32: 2, 1>} : memref<64x64xf32, #tpu.memory_space<vmem>>, vector<32x64xf32>
    %c1 = arith.constant 1 : index
    %c0_1 = arith.constant 0 : index
    %1 = tpu.strided_load %arg0[%c1, %c0_1] {strides = array<i32: 2, 1>} : memref<64x64xf32, #tpu.memory_space<vmem>>, vector<32x64xf32>
    %c1_i32 = arith.constant 1 : i32
    %2 = tpu.dynamic_rotate %1 by %c1_i32 dim 0 : vector<32x64xf32>, i32 -> vector<32x64xf32>
    %3 = tpu.iota {dimensions = array<i32: 0>} : vector<32x64xi32>
    %c16_i32 = arith.constant 16 : i32
    %c0_i32 = arith.constant 0 : i32
    %4 = arith.cmpi eq, %c16_i32, %c0_i32 : i32
    %c1_i32_2 = arith.constant 1 : i32
    %5 = arith.select %4, %c1_i32_2, %c16_i32 : i32
    %6 = vector.broadcast %5 : i32 to vector<32x64xi32>
    %7 = arith.remsi %3, %6 : vector<32x64xi32>
    %c0_i32_3 = arith.constant 0 : i32
    %8 = vector.broadcast %c0_i32_3 : i32 to vector<32x64xi32>
    %9 = arith.cmpi ne, %7, %8 : vector<32x64xi32>
    %c0_i32_4 = arith.constant 0 : i32
    %10 = vector.broadcast %c0_i32_4 : i32 to vector<32x64xi32>
    %11 = arith.cmpi slt, %7, %10 : vector<32x64xi32>
    %c0_i32_5 = arith.constant 0 : i32
    %12 = arith.cmpi slt, %5, %c0_i32_5 : i32
    %13 = vector.broadcast %12 : i1 to vector<32x64xi1>
    %14 = vector.broadcast %13 : vector<32x64xi1> to vector<32x64xi1>
    %15 = arith.xori %11, %14 : vector<32x64xi1>
    %16 = arith.andi %15, %9 : vector<32x64xi1>
    %17 = vector.broadcast %5 : i32 to vector<32x64xi32>
    %18 = arith.addi %7, %17 : vector<32x64xi32>
    %19 = arith.select %16, %18, %7 : vector<32x64xi1>, vector<32x64xi32>
    %c0_i32_6 = arith.constant 0 : i32
    %20 = vector.broadcast %c0_i32_6 : i32 to vector<32x64xi32>
    %21 = arith.cmpi eq, %19, %20 : vector<32x64xi32>
    %22 = arith.select %21, %0, %2 : vector<32x64xi1>, vector<32x64xf32>
    %23 = tpu.concatenate %22, %0, %1 in 1 : vector<32x64xf32>, vector<32x64xf32>, vector<32x64xf32> -> vector<32x192xf32>
    %24 = arith.truncf %23 : vector<32x192xf32> to vector<32x192xbf16>
    %c0_7 = arith.constant 0 : index
    %c0_8 = arith.constant 0 : index
    %25 = vector.load %arg1[%c0_7, %c0_8] : memref<192x64xbf16, #tpu.memory_space<vmem>>, vector<192x64xbf16>
    %cst = arith.constant dense<0.000000e+00> : vector<32x64xf32>
    %26 = tpu.matmul %24, %25, %cst {dimension_numbers = #tpu.dot_dimension_numbers<[1], [0], [0], [1], [0, 0, 1, 1], [], []>} : vector<32x192xbf16>, vector<192x64xbf16>, vector<32x64xf32> -> vector<32x64xf32>
    %c0_9 = arith.constant 0 : index
    %c0_10 = arith.constant 0 : index
    %27 = vector.load %arg2[%c0_9, %c0_10] : memref<3x64xf32, #tpu.memory_space<vmem>>, vector<1x64xf32>
    %28 = vector.broadcast %27 : vector<1x64xf32> to vector<32x64xf32>
    %29 = arith.addf %26, %28 : vector<32x64xf32>
    %c1_11 = arith.constant 1 : index
    %c0_12 = arith.constant 0 : index
    %30 = vector.load %arg2[%c1_11, %c0_12] : memref<3x64xf32, #tpu.memory_space<vmem>>, vector<1x64xf32>
    %31 = vector.broadcast %30 : vector<1x64xf32> to vector<32x64xf32>
    %32 = arith.mulf %29, %31 : vector<32x64xf32>
    %c2 = arith.constant 2 : index
    %c0_13 = arith.constant 0 : index
    %33 = vector.load %arg2[%c2, %c0_13] : memref<3x64xf32, #tpu.memory_space<vmem>>, vector<1x64xf32>
    %34 = vector.broadcast %33 : vector<1x64xf32> to vector<32x64xf32>
    %35 = arith.addf %32, %34 : vector<32x64xf32>
    %cst_14 = arith.constant 0.000000e+00 : f32
    %36 = vector.broadcast %cst_14 : f32 to vector<32x64xf32>
    %37 = arith.maximumf %35, %36 : vector<32x64xf32>
    %38 = arith.addf %37, %29 : vector<32x64xf32>
    %c0_15 = arith.constant 0 : index
    %c0_16 = arith.constant 0 : index
    %39 = vector.load %arg8[%c0_15, %c0_16] : memref<32x64xf32, #tpu.memory_space<vmem>>, vector<32x64xf32>
    tpu.vector_store %arg8[%c0_15, %c0_16], %38 {strides = array<i32>} : memref<32x64xf32, #tpu.memory_space<vmem>>, vector<32x64xf32>,
    %c0_17 = arith.constant 0 : index
    %c0_18 = arith.constant 0 : index
    %40 = tpu.strided_load %arg8[%c0_17, %c0_18] {strides = array<i32: 2, 1>} : memref<32x64xf32, #tpu.memory_space<vmem>>, vector<16x64xf32>
    %c1_19 = arith.constant 1 : index
    %c0_20 = arith.constant 0 : index
    %41 = tpu.strided_load %arg8[%c1_19, %c0_20] {strides = array<i32: 2, 1>} : memref<32x64xf32, #tpu.memory_space<vmem>>, vector<16x64xf32>
    %c1_i32_21 = arith.constant 1 : i32
    %42 = tpu.dynamic_rotate %41 by %c1_i32_21 dim 0 : vector<16x64xf32>, i32 -> vector<16x64xf32>
    %43 = tpu.iota {dimensions = array<i32: 0>} : vector<16x64xi32>
    %c8_i32 = arith.constant 8 : i32
    %c0_i32_22 = arith.constant 0 : i32
    %44 = arith.cmpi eq, %c8_i32, %c0_i32_22 : i32
    %c1_i32_23 = arith.constant 1 : i32
    %45 = arith.select %44, %c1_i32_23, %c8_i32 : i32
    %46 = vector.broadcast %45 : i32 to vector<16x64xi32>
    %47 = arith.remsi %43, %46 : vector<16x64xi32>
    %c0_i32_24 = arith.constant 0 : i32
    %48 = vector.broadcast %c0_i32_24 : i32 to vector<16x64xi32>
    %49 = arith.cmpi ne, %47, %48 : vector<16x64xi32>
    %c0_i32_25 = arith.constant 0 : i32
    %50 = vector.broadcast %c0_i32_25 : i32 to vector<16x64xi32>
    %51 = arith.cmpi slt, %47, %50 : vector<16x64xi32>
    %c0_i32_26 = arith.constant 0 : i32
    %52 = arith.cmpi slt, %45, %c0_i32_26 : i32
    %53 = vector.broadcast %52 : i1 to vector<16x64xi1>
    %54 = vector.broadcast %53 : vector<16x64xi1> to vector<16x64xi1>
    %55 = arith.xori %51, %54 : vector<16x64xi1>
    %56 = arith.andi %55, %49 : vector<16x64xi1>
    %57 = vector.broadcast %45 : i32 to vector<16x64xi32>
    %58 = arith.addi %47, %57 : vector<16x64xi32>
    %59 = arith.select %56, %58, %47 : vector<16x64xi1>, vector<16x64xi32>
    %c0_i32_27 = arith.constant 0 : i32
    %60 = vector.broadcast %c0_i32_27 : i32 to vector<16x64xi32>
    %61 = arith.cmpi eq, %59, %60 : vector<16x64xi32>
    %62 = arith.select %61, %40, %42 : vector<16x64xi1>, vector<16x64xf32>
    %63 = tpu.concatenate %62, %40, %41 in 1 : vector<16x64xf32>, vector<16x64xf32>, vector<16x64xf32> -> vector<16x192xf32>
    %64 = arith.truncf %63 : vector<16x192xf32> to vector<16x192xbf16>
    %c0_28 = arith.constant 0 : index
    %c0_29 = arith.constant 0 : index
    %65 = vector.load %arg3[%c0_28, %c0_29] : memref<192x32xbf16, #tpu.memory_space<vmem>>, vector<192x32xbf16>
    %cst_30 = arith.constant dense<0.000000e+00> : vector<16x32xf32>
    %66 = tpu.matmul %64, %65, %cst_30 {dimension_numbers = #tpu.dot_dimension_numbers<[1], [0], [0], [1], [0, 0, 1, 1], [], []>} : vector<16x192xbf16>, vector<192x32xbf16>, vector<16x32xf32> -> vector<16x32xf32>
    %c0_31 = arith.constant 0 : index
    %c0_32 = arith.constant 0 : index
    %67 = vector.load %arg4[%c0_31, %c0_32] : memref<1x32xf32, #tpu.memory_space<vmem>>, vector<1x32xf32>
    %68 = vector.broadcast %67 : vector<1x32xf32> to vector<16x32xf32>
    %69 = arith.addf %66, %68 : vector<16x32xf32>
    %70 = arith.addf %69, %69 : vector<16x32xf32>
    %71 = vector.shape_cast %70 : vector<16x32xf32> to vector<2x8x32xf32>
    %cst_33 = arith.constant dense<0.000000e+00> : vector<2x32xf32>
    %72 = vector.multi_reduction <add>, %71, %cst_33 [1] : vector<2x8x32xf32> to vector<2x32xf32>
    %cst_34 = arith.constant 8.000000e+00 : f32
    %73 = vector.broadcast %cst_34 : f32 to vector<2x32xf32>
    %74 = arith.divf %72, %73 : vector<2x32xf32>
    %75 = arith.truncf %74 : vector<2x32xf32> to vector<2x32xbf16>
    %c0_35 = arith.constant 0 : index
    %c0_36 = arith.constant 0 : index
    %76 = vector.load %arg5[%c0_35, %c0_36] : memref<32x6xbf16, #tpu.memory_space<vmem>>, vector<32x6xbf16>
    %cst_37 = arith.constant dense<0.000000e+00> : vector<2x6xf32>
    %77 = tpu.matmul %75, %76, %cst_37 {dimension_numbers = #tpu.dot_dimension_numbers<[1], [0], [0], [1], [0, 0, 1, 1], [], []>} : vector<2x32xbf16>, vector<32x6xbf16>, vector<2x6xf32> -> vector<2x6xf32>
    %c0_38 = arith.constant 0 : index
    %c0_39 = arith.constant 0 : index
    %78 = vector.load %arg6[%c0_38, %c0_39] : memref<1x6xf32, #tpu.memory_space<vmem>>, vector<1x6xf32>
    %79 = vector.broadcast %78 : vector<1x6xf32> to vector<2x6xf32>
    %80 = arith.addf %77, %79 : vector<2x6xf32>
    %c0_40 = arith.constant 0 : index
    %c0_41 = arith.constant 0 : index
    %81 = vector.load %arg7[%c0_40, %c0_41] : memref<2x6xf32, #tpu.memory_space<vmem>>, vector<2x6xf32>
    tpu.vector_store %arg7[%c0_40, %c0_41], %80 {strides = array<i32>} : memref<2x6xf32, #tpu.memory_space<vmem>>, vector<2x6xf32>,
    return
  }
}

</mosaic_0001>

<llo_original>
// kernel: tpu_custom_call.1
$region0: #{tpu_custom_call.1}
  #allocation0 [shape = 'u32[]', space=smem, size = 0x4, offset = 0x4, fixed_abs, tag = 'smem constant byte address 0x4 - core index']
  #allocation1 [shape = 'u32[144,128]{1,0:T(1,128)}', space=vmem, size = 0x12000, scoped, tag = 'internal scratch']
  #allocation2 [shape = 'f32[32,64]{1,0:T(8,128)}', space=vmem, size = 0x4000, scoped, tag = 'scratch operand']
  %s0 = inlined_call_operand.vmem [shape: f32[64,64], index: 0, kind: input, shape index: {}]
  %s1 = inlined_call_operand.vmem [shape: bf16[192,64], index: 1, kind: input, shape index: {}]
  %s2 = inlined_call_operand.vmem [shape: f32[3,64], index: 2, kind: input, shape index: {}]
  %s3 = inlined_call_operand.vmem [shape: bf16[192,32], index: 3, kind: input, shape index: {}]
  %s4 = inlined_call_operand.vmem [shape: f32[1,32], index: 4, kind: input, shape index: {}]
  %s5 = inlined_call_operand.vmem [shape: bf16[32,6], index: 5, kind: input, shape index: {}]
  %s6 = inlined_call_operand.vmem [shape: f32[1,6], index: 6, kind: input, shape index: {}]
  %s7 = inlined_call_operand.hbm [shape: f32[2,6], index: 7, kind: output, shape index: {}]
  %s8 = sld [smem:[#allocation0]]
  $region38: #{tpu_custom_call.1} parent=0
    _
  %s10 = ssub.s32 1, %s8
  %s11 = scalar_select 0, %s10, %s8
  $region1: #{tpu_custom_call.1} parent=0
    #allocation3 [shape = 'u8[1024]{0}', space=vmem, size = 0x400, scoped, tag = 'output window, operand 0, single buffered']
    #allocation4 [shape = 's32[1]{0}', space=sflag, size = 0x4, scoped, tag = 'scoped memory for tpu_custom_call.1']
    %12 = vsyncpa [#allocation4], 0
    // Predicated region
    $region2: #{tpu_custom_call.1} parent=1 // pred_check
      _
    $region3: #{tpu_custom_call.1} parent=1 // pred_check_branch
      %14 = sbr.rel (0) target = $region5
    $region4: #{tpu_custom_call.1} parent=1 // pred_region
      _
    $region5: #{tpu_custom_call.1} parent=1 // pred_fallthru
      _
    // Predicated region
    $region6: #{tpu_custom_call.1} parent=1 // pred_check
      _
    $region7: #{tpu_custom_call.1} parent=1 // pred_check_branch
      %16 = sbr.rel (0) target = $region9
    $region8: #{tpu_custom_call.1} parent=1 // pred_region
      _
    $region9: #{tpu_custom_call.1} parent=1 // pred_fallthru
      _
    // Predicated region
    $region10: #{tpu_custom_call.1} parent=1 // pred_check
      _
    $region11: #{tpu_custom_call.1} parent=1 // pred_check_branch
      %18 = sbr.rel (0) target = $region13
    $region12: #{tpu_custom_call.1} parent=1 // pred_region
      _
    $region13: #{tpu_custom_call.1} parent=1 // pred_fallthru
      _
    // Predicated region
    $region14: #{tpu_custom_call.1} parent=1 // pred_check
      _
    $region15: #{tpu_custom_call.1} parent=1 // pred_check_branch
      %20 = sbr.rel (0) target = $region17
    $region16: #{tpu_custom_call.1} parent=1 // pred_region
      _
    $region17: #{tpu_custom_call.1} parent=1 // pred_fallthru
      _
    // Predicated region
    $region18: #{tpu_custom_call.1} parent=1 // pred_check
      _
    $region19: #{tpu_custom_call.1} parent=1 // pred_check_branch
      %22 = sbr.rel (0) target = $region21
    $region20: #{tpu_custom_call.1} parent=1 // pred_region
      _
    $region21: #{tpu_custom_call.1} parent=1 // pred_fallthru
      _
    // Predicated region
    $region22: #{tpu_custom_call.1} parent=1 // pred_check
      _
    $region23: #{tpu_custom_call.1} parent=1 // pred_check_branch
      %24 = sbr.rel (0) target = $region25
    $region24: #{tpu_custom_call.1} parent=1 // pred_region
      _
    $region25: #{tpu_custom_call.1} parent=1 // pred_fallthru
      _
    // Predicated region
    $region26: #{tpu_custom_call.1} parent=1 // pred_check
      _
    $region27: #{tpu_custom_call.1} parent=1 // pred_check_branch
      %26 = sbr.rel (0) target = $region29
    $region28: #{tpu_custom_call.1} parent=1 // pred_region
      _
    $region29: #{tpu_custom_call.1} parent=1 // pred_fallthru
      _
    %v28 = vld [vmem:[%s0] ss:$2 sm:$0xff]
    %s29 = scalar_lea.vmem %s0, 16
    %v30 = vld [vmem:[%s29] ss:$2 sm:$0xff]
    %s31 = scalar_lea.vmem %s0, 32
    %v32 = vld [vmem:[%s31] ss:$2 sm:$0xff]
    %s33 = scalar_lea.vmem %s0, 48
    %v34 = vld [vmem:[%s33] ss:$2 sm:$0xff]
    %s35 = scalar_lea.vmem %s0, 1
    %v36 = vld [vmem:[%s35] ss:$2 sm:$0xff]
    %s37 = scalar_lea.vmem %s0, 17
    %v38 = vld [vmem:[%s37] ss:$2 sm:$0xff]
    %s39 = scalar_lea.vmem %s0, 33
    %v40 = vld [vmem:[%s39] ss:$2 sm:$0xff]
    %s41 = scalar_lea.vmem %s0, 49
    %v42 = vld [vmem:[%s41] ss:$2 sm:$0xff]
    %v43 = vrot.slane %v36, 7
    %v44 = vrot.slane %v38, 7
    %v45 = vrot.slane %v40, 7
    %v46 = vrot.slane %v42, 7
    %v47 = vlaneseq
    %v48 = vshrl.u32 %v47, 7
    %vm49 = vcmp.lt.s32.totalorder %v48, 1
    %v50 = vsel %vm49, %v45, %v46
    %v51 = vsel %vm49, %v44, %v45
    %v52 = vsel %vm49, %v43, %v44
    %v53 = vsel %vm49, %v46, %v43
    %v54 = vadd.s32 %v48, 8
    %v55 = vadd.s32 %v48, 16
    %v56 = vadd.s32 %v48, 24
    %vm57 = vcmp.lt.s32.totalorder %v48, 0
    %v58 = vsub.s32 0, %v48
    %v59 = vsel %vm57, %v58, %v48
    %v60 = vshrl.u32 %v59, 4
    %v61 = vand.u32 %v59, 15
    %v62 = vsub.s32 0, %v61
    %v63 = vsel %vm57, %v62, %v61
    %vm64 = vcmp.lt.s32.totalorder %v54, 0
    %v65 = vsub.s32 0, %v54
    %v66 = vsel %vm64, %v65, %v54
    %v67 = vshrl.u32 %v66, 4
    %v68 = vand.u32 %v66, 15
    %v69 = vsub.s32 0, %v68
    %v70 = vsel %vm64, %v69, %v68
    %vm71 = vcmp.lt.s32.totalorder %v55, 0
    %v72 = vsub.s32 0, %v55
    %v73 = vsel %vm71, %v72, %v55
    %v74 = vshrl.u32 %v73, 4
    %v75 = vand.u32 %v73, 15
    %v76 = vsub.s32 0, %v75
    %v77 = vsel %vm71, %v76, %v75
    %vm78 = vcmp.lt.s32.totalorder %v56, 0
    %v79 = vsub.s32 0, %v56
    %v80 = vsel %vm78, %v79, %v56
    %v81 = vshrl.u32 %v80, 4
    %v82 = vand.u32 %v80, 15
    %v83 = vsub.s32 0, %v82
    %v84 = vsel %vm78, %v83, %v82
    %vm85 = vcmp.ne.s32.totalorder %v63, 0
    %vm86 = vcmp.ne.s32.totalorder %v70, 0
    %vm87 = vcmp.ne.s32.totalorder %v77, 0
    %vm88 = vcmp.ne.s32.totalorder %v84, 0
    %vm89 = vcmp.lt.s32.totalorder %v63, 0
    %vm90 = vcmp.lt.s32.totalorder %v70, 0
    %vm91 = vcmp.lt.s32.totalorder %v77, 0
    %vm92 = vcmp.lt.s32.totalorder %v84, 0
    %vm93 = vmand %vm89, %vm85
    %vm94 = vmand %vm90, %vm86
    %vm95 = vmand %vm91, %vm87
    %vm96 = vmand %vm92, %vm88
    %v97 = vadd.s32 %v63, 16
    %v98 = vadd.s32 %v70, 16
    %v99 = vadd.s32 %v77, 16
    %v100 = vadd.s32 %v84, 16
    %v101 = vsel %vm93, %v97, %v63
    %v102 = vsel %vm94, %v98, %v70
    %v103 = vsel %vm95, %v99, %v77
    %v104 = vsel %vm96, %v100, %v84
    %vm105 = vcmp.eq.s32.totalorder %v101, 0
    %vm106 = vcmp.eq.s32.totalorder %v102, 0
    %vm107 = vcmp.eq.s32.totalorder %v103, 0
    %vm108 = vcmp.eq.s32.totalorder %v104, 0
    %v109 = vsel %vm105, %v28, %v53
    %v110 = vsel %vm106, %v30, %v52
    %v111 = vsel %vm107, %v32, %v51
    %v112 = vsel %vm108, %v34, %v50
    %117 = vrot.lane.b32.xlu0 %v28, 64
    %v118 = vpop.permute.xlu0 %117
    %119 = vrot.lane.b32.xlu0 %v30, 64
    %v120 = vpop.permute.xlu0 %119
    %121 = vrot.lane.b32.xlu0 %v32, 64
    %v122 = vpop.permute.xlu0 %121
    %123 = vrot.lane.b32.xlu0 %v34, 64
    %v124 = vpop.permute.xlu0 %123
    %vm129 = vcmask 523264
    %v130 = vsel %vm129, %v109, %v118
    %v131 = vsel %vm129, %v110, %v120
    %v132 = vsel %vm129, %v111, %v122
    %v133 = vsel %vm129, %v112, %v124
    %v134 = vpack.c.bf16 %v131, %v130
    %v135 = vpack.c.bf16 %v38, %v36
    %v136 = vpack.c.bf16 %v133, %v132
    %v137 = vpack.c.bf16 %v42, %v40
    %v138 = vld [vmem:[%s1] sm:$0xf]
    %v139 = vld [vmem:[%s1 + $0x4] sm:$0xf]
    %v140 = vld [vmem:[%s1 + $0x8] sm:$0xf]
    %v141 = vld [vmem:[%s1 + $0xc] sm:$0xf]
    %v142 = vld [vmem:[%s1 + $0x10] sm:$0xf]
    %v143 = vld [vmem:[%s1 + $0x14] sm:$0xf]
    %v144 = vld [vmem:[%s1 + $0x18] sm:$0xf]
    %v145 = vld [vmem:[%s1 + $0x1c] sm:$0xf]
    %v146 = vld [vmem:[%s1 + $0x20] sm:$0xf]
    %v147 = vld [vmem:[%s1 + $0x24] sm:$0xf]
    %v148 = vld [vmem:[%s1 + $0x28] sm:$0xf]
    %v149 = vld [vmem:[%s1 + $0x2c] sm:$0xf]
    %v150 = vld [vmem:[%s1 + $0x30] sm:$0xf]
    %v151 = vld [vmem:[%s1 + $0x34] sm:$0xf]
    %v152 = vld [vmem:[%s1 + $0x38] sm:$0xf]
    %v153 = vld [vmem:[%s1 + $0x3c] sm:$0xf]
    %v154 = vld [vmem:[%s1 + $0x40] sm:$0xf]
    %v155 = vld [vmem:[%s1 + $0x44] sm:$0xf]
    %v156 = vld [vmem:[%s1 + $0x48] sm:$0xf]
    %v157 = vld [vmem:[%s1 + $0x4c] sm:$0xf]
    %v158 = vld [vmem:[%s1 + $0x50] sm:$0xf]
    %v159 = vld [vmem:[%s1 + $0x54] sm:$0xf]
    %v160 = vld [vmem:[%s1 + $0x58] sm:$0xf]
    %v161 = vld [vmem:[%s1 + $0x5c] sm:$0xf]
    %v162 = vld [vmem:[%s2] sm:$0x1]
    %v163 = vlaneseq
    %v164 = vshrl.u32 %v163, 7
    %v165 = vsub.s32 0, %v164
    %v166 = vrot.slane %v162, %v165
    %v191 = vunpack.c.l.b16 %v138
    %v192 = vunpack.c.l.b16 %v139
    %v193 = vunpack.c.l.b16 %v140
    %v194 = vunpack.c.l.b16 %v141
    %v195 = vunpack.c.l.b16 %v142
    %v196 = vunpack.c.l.b16 %v143
    %v197 = vunpack.c.l.b16 %v144
    %v198 = vunpack.c.l.b16 %v145
    %v199 = vunpack.c.l.b16 %v146
    %v200 = vunpack.c.l.b16 %v147
    %v201 = vunpack.c.l.b16 %v148
    %v202 = vunpack.c.l.b16 %v149
    %v203 = vunpack.c.l.b16 %v150
    %v204 = vunpack.c.l.b16 %v151
    %v205 = vunpack.c.l.b16 %v152
    %v206 = vunpack.c.l.b16 %v153
    %v207 = vunpack.c.l.b16 %v154
    %v208 = vunpack.c.l.b16 %v155
    %v209 = vunpack.c.l.b16 %v156
    %v210 = vunpack.c.l.b16 %v157
    %v211 = vunpack.c.l.b16 %v158
    %v212 = vunpack.c.l.b16 %v159
    %v213 = vunpack.c.l.b16 %v160
    %v214 = vunpack.c.l.b16 %v161
    %v215 = vpack.c.b16 %v192, %v191
    %v216 = vpack.c.b16 %v194, %v193
    %v217 = vpack.c.b16 %v196, %v195
    %v218 = vpack.c.b16 %v198, %v197
    %v219 = vpack.c.b16 %v200, %v199
    %v220 = vpack.c.b16 %v202, %v201
    %v221 = vpack.c.b16 %v204, %v203
    %v222 = vpack.c.b16 %v206, %v205
    %v223 = vpack.c.b16 %v208, %v207
    %v224 = vpack.c.b16 %v210, %v209
    %v225 = vpack.c.b16 %v212, %v211
    %v226 = vpack.c.b16 %v214, %v213
    %v240 = vsel %vm129, %v135, 0
    %v243 = vsel %vm129, %v137, 0
    %245 = vmatprep.subr.bf16.mxu0 0
    %246 = vmatpush1.bf16.msra.mxu0 %v222
    %247 = vmatprep.subr.bf16.mxu0 0
    %248 = vmatpush1.bf16.msra.mxu0 %v221
    %249 = vmatprep.subr.bf16.mxu0 0
    %250 = vmatpush1.bf16.msra.mxu0 %v220
    %251 = vmatprep.subr.bf16.mxu0 0
    %252 = vmatpush1.bf16.msra.mxu0 %v219
    %253 = vmatprep.subr.bf16.mxu0 0
    %254 = vmatpush1.bf16.msra.mxu0 %v218
    %255 = vmatprep.subr.bf16.mxu0 0
    %256 = vmatpush1.bf16.msra.mxu0 %v217
    %257 = vmatprep.subr.bf16.mxu0 0
    %258 = vmatpush1.bf16.msra.mxu0 %v216
    %259 = vmatprep.subr.bf16.mxu0 0
    %260 = vmatpush1.bf16.msra.mxu0 %v215
    %261 = vmatprep.subr.bf16.mxu0 0
    %262 = vmatpush2.bf16.msra.mxu0 0
    %263 = vmatprep.subr.bf16.mxu0 0
    %264 = vmatpush2.bf16.msra.mxu0 0
    %265 = vmatprep.subr.bf16.mxu0 0
    %266 = vmatpush2.bf16.msra.mxu0 0
    %267 = vmatprep.subr.bf16.mxu0 0
    %268 = vmatpush2.bf16.msra.mxu0 0
    %269 = vmatprep.subr.bf16.mxu0 0
    %270 = vmatpush2.bf16.msra.mxu0 %v226
    %271 = vmatprep.subr.bf16.mxu0 0
    %272 = vmatpush2.bf16.msra.mxu0 %v225
    %273 = vmatprep.subr.bf16.mxu0 0
    %274 = vmatpush2.bf16.msra.mxu0 %v224
    %275 = vmatprep.subr.bf16.mxu0 0
    %276 = vmatpush2.bf16.msra.mxu0 %v223
    %277 = vmatprep.mubr.bf16.mxu0 %v240
    %278 = vmatmul.mubr.bf16.gmra.mxu0 %v134
    %v279 = vpop.f32.mrf.mxu0
    %v280 = vadd.f32 %v166, %v279
    %v281 = vpop.f32.mrf.mxu0
    %v282 = vpop.f32.mrf.mxu0
    %v283 = vadd.f32 %v166, %v282
    %v284 = vpop.f32.mrf.mxu0
    %285 = vmatprep.mubr.bf16.mxu0 %v243
    %286 = vmatmul.mubr.bf16.gmra.mxu0 %v136
    %v287 = vpop.f32.mrf.mxu0
    %v288 = vadd.f32 %v166, %v287
    %v289 = vpop.f32.mrf.mxu0
    %v290 = vpop.f32.mrf.mxu0
    %v291 = vadd.f32 %v166, %v290
    %v292 = vpop.f32.mrf.mxu0
    %293 = vdwg.mxu0
    %v294 = vld [vmem:[%s2 + $0x1] sm:$0x1]
    %v295 = vlaneseq
    %v296 = vshrl.u32 %v295, 7
    %v297 = vsub.s32 0, %v296
    %v298 = vrot.slane %v294, %v297
    %v299 = vmul.f32 %v280, %v298
    %v300 = vmul.f32 %v283, %v298
    %v301 = vmul.f32 %v288, %v298
    %v302 = vmul.f32 %v291, %v298
    %v303 = vld [vmem:[%s2 + $0x2] sm:$0x1]
    %v304 = vlaneseq
    %v305 = vshrl.u32 %v304, 7
    %v306 = vsub.s32 0, %v305
    %v307 = vrot.slane %v303, %v306
    %v308 = vadd.f32 %v299, %v307
    %v309 = vadd.f32 %v300, %v307
    %v310 = vadd.f32 %v301, %v307
    %v311 = vadd.f32 %v302, %v307
    %v312 = vmax.f32 %v308, 0.0
    %v313 = vmax.f32 %v309, 0.0
    %v314 = vmax.f32 %v310, 0.0
    %v315 = vmax.f32 %v311, 0.0
    %v316 = vadd.f32 %v312, %v280
    %v317 = vadd.f32 %v313, %v283
    %v318 = vadd.f32 %v314, %v288
    %v319 = vadd.f32 %v315, %v291
    %320 = vst.msk [vmem:[#allocation2] sm:$0xff] %vm129, %v316
    %321 = vst.msk [vmem:[#allocation2 + $0x8] sm:$0xff] %vm129, %v317
    %322 = vst.msk [vmem:[#allocation2 + $0x10] sm:$0xff] %vm129, %v318
    %323 = vst.msk [vmem:[#allocation2 + $0x18] sm:$0xff] %vm129, %v319
    %v324 = vld [vmem:[#allocation2] ss:$2 sm:$0xff]
    %s325 = scalar_lea.vmem [#allocation2], 16
    %v326 = vld [vmem:[%s325] ss:$2 sm:$0xff]
    %s327 = scalar_lea.vmem [#allocation2], 1
    %v328 = vld [vmem:[%s327] ss:$2 sm:$0xff]
    %s329 = scalar_lea.vmem [#allocation2], 17
    %v330 = vld [vmem:[%s329] ss:$2 sm:$0xff]
    %v331 = vrot.slane %v328, 7
    %v332 = vrot.slane %v330, 7
    %v333 = vsel %vm49, %v331, %v332
    %v334 = vsel %vm49, %v332, %v331
    %vm335 = vcmp.lt.s32.totalorder %v48, 0
    %v336 = vsub.s32 0, %v48
    %v337 = vsel %vm335, %v336, %v48
    %v338 = vshrl.u32 %v337, 3
    %v339 = vand.u32 %v337, 7
    %v340 = vsub.s32 0, %v339
    %v341 = vsel %vm335, %v340, %v339
    %vm342 = vcmp.lt.s32.totalorder %v54, 0
    %v343 = vsub.s32 0, %v54
    %v344 = vsel %vm342, %v343, %v54
    %v345 = vshrl.u32 %v344, 3
    %v346 = vand.u32 %v344, 7
    %v347 = vsub.s32 0, %v346
    %v348 = vsel %vm342, %v347, %v346
    %vm349 = vcmp.ne.s32.totalorder %v341, 0
    %vm350 = vcmp.ne.s32.totalorder %v348, 0
    %vm351 = vcmp.lt.s32.totalorder %v341, 0
    %vm352 = vcmp.lt.s32.totalorder %v348, 0
    %vm353 = vmand %vm351, %vm349
    %vm354 = vmand %vm352, %vm350
    %v355 = vadd.s32 %v341, 8
    %v356 = vadd.s32 %v348, 8
    %v357 = vsel %vm353, %v355, %v341
    %v358 = vsel %vm354, %v356, %v348
    %vm359 = vcmp.eq.s32.totalorder %v357, 0
    %vm360 = vcmp.eq.s32.totalorder %v358, 0
    %v361 = vsel %vm359, %v324, %v334
    %v362 = vsel %vm360, %v326, %v333
    %365 = vrot.lane.b32.xlu0 %v324, 64
    %v366 = vpop.permute.xlu0 %365
    %367 = vrot.lane.b32.xlu0 %v326, 64
    %v368 = vpop.permute.xlu0 %367
    %v371 = vsel %vm129, %v361, %v366
    %v372 = vsel %vm129, %v362, %v368
    %v373 = vpack.c.bf16 %v372, %v371
    %v374 = vpack.c.bf16 %v330, %v328
    %v375 = vld [vmem:[%s3] sm:$0xf]
    %v376 = vld [vmem:[%s3 + $0x4] sm:$0xf]
    %v377 = vld [vmem:[%s3 + $0x8] sm:$0xf]
    %v378 = vld [vmem:[%s3 + $0xc] sm:$0xf]
    %v379 = vld [vmem:[%s3 + $0x10] sm:$0xf]
    %v380 = vld [vmem:[%s3 + $0x14] sm:$0xf]
    %v381 = vld [vmem:[%s3 + $0x18] sm:$0xf]
    %v382 = vld [vmem:[%s3 + $0x1c] sm:$0xf]
    %v383 = vld [vmem:[%s3 + $0x20] sm:$0xf]
    %v384 = vld [vmem:[%s3 + $0x24] sm:$0xf]
    %v385 = vld [vmem:[%s3 + $0x28] sm:$0xf]
    %v386 = vld [vmem:[%s3 + $0x2c] sm:$0xf]
    %v387 = vld [vmem:[%s3 + $0x30] sm:$0xf]
    %v388 = vld [vmem:[%s3 + $0x34] sm:$0xf]
    %v389 = vld [vmem:[%s3 + $0x38] sm:$0xf]
    %v390 = vld [vmem:[%s3 + $0x3c] sm:$0xf]
    %v391 = vld [vmem:[%s3 + $0x40] sm:$0xf]
    %v392 = vld [vmem:[%s3 + $0x44] sm:$0xf]
    %v393 = vld [vmem:[%s3 + $0x48] sm:$0xf]
    %v394 = vld [vmem:[%s3 + $0x4c] sm:$0xf]
    %v395 = vld [vmem:[%s3 + $0x50] sm:$0xf]
    %v396 = vld [vmem:[%s3 + $0x54] sm:$0xf]
    %v397 = vld [vmem:[%s3 + $0x58] sm:$0xf]
    %v398 = vld [vmem:[%s3 + $0x5c] sm:$0xf]
    %v399 = vld [vmem:[%s4] sm:$0x1]
    %v401 = vlaneseq
    %v402 = vshrl.u32 %v401, 7
    %v403 = vsub.s32 0, %v402
    %v404 = vrot.slane %v399, %v403
    %v430 = vunpack.c.l.b16 %v375
    %v431 = vunpack.c.l.b16 %v376
    %v432 = vunpack.c.l.b16 %v377
    %v433 = vunpack.c.l.b16 %v378
    %v434 = vunpack.c.l.b16 %v379
    %v435 = vunpack.c.l.b16 %v380
    %v436 = vunpack.c.l.b16 %v381
    %v437 = vunpack.c.l.b16 %v382
    %v438 = vunpack.c.l.b16 %v383
    %v439 = vunpack.c.l.b16 %v384
    %v440 = vunpack.c.l.b16 %v385
    %v441 = vunpack.c.l.b16 %v386
    %v442 = vunpack.c.l.b16 %v387
    %v443 = vunpack.c.l.b16 %v388
    %v444 = vunpack.c.l.b16 %v389
    %v445 = vunpack.c.l.b16 %v390
    %v446 = vunpack.c.l.b16 %v391
    %v447 = vunpack.c.l.b16 %v392
    %v448 = vunpack.c.l.b16 %v393
    %v449 = vunpack.c.l.b16 %v394
    %v450 = vunpack.c.l.b16 %v395
    %v451 = vunpack.c.l.b16 %v396
    %v452 = vunpack.c.l.b16 %v397
    %v453 = vunpack.c.l.b16 %v398
    %v454 = vpack.c.b16 %v431, %v430
    %v455 = vpack.c.b16 %v433, %v432
    %v456 = vpack.c.b16 %v435, %v434
    %v457 = vpack.c.b16 %v437, %v436
    %v458 = vpack.c.b16 %v439, %v438
    %v459 = vpack.c.b16 %v441, %v440
    %v460 = vpack.c.b16 %v443, %v442
    %v461 = vpack.c.b16 %v445, %v444
    %v462 = vpack.c.b16 %v447, %v446
    %v463 = vpack.c.b16 %v449, %v448
    %v464 = vpack.c.b16 %v451, %v450
    %v465 = vpack.c.b16 %v453, %v452
    %v479 = vsel %vm129, %v374, 0
    %481 = vmatprep.subr.bf16.mxu0 0
    %482 = vmatpush1.bf16.msra.mxu0 %v461
    %483 = vmatprep.subr.bf16.mxu0 0
    %484 = vmatpush1.bf16.msra.mxu0 %v460
    %485 = vmatprep.subr.bf16.mxu0 0
    %486 = vmatpush1.bf16.msra.mxu0 %v459
    %487 = vmatprep.subr.bf16.mxu0 0
    %488 = vmatpush1.bf16.msra.mxu0 %v458
    %489 = vmatprep.subr.bf16.mxu0 0
    %490 = vmatpush1.bf16.msra.mxu0 %v457
    %491 = vmatprep.subr.bf16.mxu0 0
    %492 = vmatpush1.bf16.msra.mxu0 %v456
    %493 = vmatprep.subr.bf16.mxu0 0
    %494 = vmatpush1.bf16.msra.mxu0 %v455
    %495 = vmatprep.subr.bf16.mxu0 0
    %496 = vmatpush1.bf16.msra.mxu0 %v454
    %497 = vmatprep.subr.bf16.mxu0 0
    %498 = vmatpush2.bf16.msra.mxu0 0
    %499 = vmatprep.subr.bf16.mxu0 0
    %500 = vmatpush2.bf16.msra.mxu0 0
    %501 = vmatprep.subr.bf16.mxu0 0
    %502 = vmatpush2.bf16.msra.mxu0 0
    %503 = vmatprep.subr.bf16.mxu0 0
    %504 = vmatpush2.bf16.msra.mxu0 0
    %505 = vmatprep.subr.bf16.mxu0 0
    %506 = vmatpush2.bf16.msra.mxu0 %v465
    %507 = vmatprep.subr.bf16.mxu0 0
    %508 = vmatpush2.bf16.msra.mxu0 %v464
    %509 = vmatprep.subr.bf16.mxu0 0
    %510 = vmatpush2.bf16.msra.mxu0 %v463
    %511 = vmatprep.subr.bf16.mxu0 0
    %512 = vmatpush2.bf16.msra.mxu0 %v462
    %513 = vmatprep.mubr.bf16.mxu0 %v479
    %514 = vmatmul.mubr.bf16.gmra.mxu0 %v373
    %v515 = vpop.f32.mrf.mxu0
    %v516 = vadd.f32 %v404, %v515
    %v517 = vpop.f32.mrf.mxu0
    %v518 = vpop.f32.mrf.mxu0
    %v519 = vadd.f32 %v404, %v518
    %v520 = vpop.f32.mrf.mxu0
    %521 = vdwg.mxu0
    %v522 = vadd.f32 %v516, %v516
    %v523 = vadd.f32 %v519, %v519
    %vm524 = vcmask 261120
    %v525 = vsel %vm524, %v522, 0.0
    %v526 = vrot.slane %v525, 4
    %v527 = vadd.f32 %v525, %v526
    %v528 = vrot.slane %v527, 2
    %v529 = vadd.f32 %v527, %v528
    %v530 = vrot.slane %v529, 1
    %v531 = vadd.f32 %v529, %v530
    %v532 = vsel %vm524, %v523, 0.0
    %v533 = vrot.slane %v532, 4
    %v534 = vadd.f32 %v532, %v533
    %v535 = vrot.slane %v534, 2
    %v536 = vadd.f32 %v534, %v535
    %v537 = vrot.slane %v536, 1
    %v538 = vadd.f32 %v536, %v537
    %v539 = vrcp.pop 8.0
    %v540 = vmul.f32 %v531, %v539
    %v541 = vmul.f32 %v538, %v539
    %v542 = vpack.c.bf16 %v540, %v540
    %v543 = vpack.c.bf16 %v541, %v541
    %v544 = vld [vmem:[%s5] sm:$0xf]
    %v545 = vld [vmem:[%s5 + $0x4] sm:$0xf]
    %v546 = vld [vmem:[%s5 + $0x8] sm:$0xf]
    %v547 = vld [vmem:[%s5 + $0xc] sm:$0xf]
    %v548 = vld [vmem:[%s6] sm:$0x1]
    %v550 = vlaneseq
    %v551 = vshrl.u32 %v550, 7
    %v552 = vsub.s32 0, %v551
    %v553 = vrot.slane %v548, %v552
    %v557 = vunpack.c.l.b16 %v542
    %v558 = vunpack.c.l.b16 %v543
    %vm559 = vcmask 1041409
    %v560 = vsel %vm559, %v558, %v557
    %v561 = vpack.c.b16 %v560, %v560
    %v566 = vunpack.c.l.b16 %v544
    %v567 = vunpack.c.l.b16 %v545
    %v568 = vunpack.c.l.b16 %v546
    %v569 = vunpack.c.l.b16 %v547
    %v570 = vpack.c.b16 %v567, %v566
    %v571 = vpack.c.b16 %v569, %v568
    %v575 = vsel %vm524, %v561, 0
    %577 = vmatprep.subr.bf16.mxu0 0
    %578 = vmatpush1.bf16.msra.mxu0 0
    %579 = vmatprep.subr.bf16.mxu0 0
    %580 = vmatpush1.bf16.msra.mxu0 0
    %581 = vmatprep.subr.bf16.mxu0 0
    %582 = vmatpush1.bf16.msra.mxu0 0
    %583 = vmatprep.subr.bf16.mxu0 0
    %584 = vmatpush1.bf16.msra.mxu0 0
    %585 = vmatprep.subr.bf16.mxu0 0
    %586 = vmatpush1.bf16.msra.mxu0 0
    %587 = vmatprep.subr.bf16.mxu0 0
    %588 = vmatpush1.bf16.msra.mxu0 0
    %589 = vmatprep.subr.bf16.mxu0 0
    %590 = vmatpush1.bf16.msra.mxu0 %v571
    %591 = vmatprep.subr.bf16.mxu0 0
    %592 = vmatpush1.bf16.msra.mxu0 %v570
    %593 = vmatprep.subr.bf16.mxu0 0
    %594 = vmatpush2.bf16.msra.mxu0 0
    %595 = vmatprep.subr.bf16.mxu0 0
    %596 = vmatpush2.bf16.msra.mxu0 0
    %597 = vmatprep.subr.bf16.mxu0 0
    %598 = vmatpush2.bf16.msra.mxu0 0
    %599 = vmatprep.subr.bf16.mxu0 0
    %600 = vmatpush2.bf16.msra.mxu0 0
    %601 = vmatprep.subr.bf16.mxu0 0
    %602 = vmatpush2.bf16.msra.mxu0 0
    %603 = vmatprep.subr.bf16.mxu0 0
    %604 = vmatpush2.bf16.msra.mxu0 0
    %605 = vmatprep.subr.bf16.mxu0 0
    %606 = vmatpush2.bf16.msra.mxu0 0
    %607 = vmatprep.subr.bf16.mxu0 0
    %608 = vmatpush2.bf16.msra.mxu0 0
    %609 = vmatprep.mubr.bf16.mxu0 0
    %610 = vmatmul.mubr.bf16.gmra.mxu0 %v575
    %v611 = vpop.f32.mrf.mxu0
    %v612 = vadd.f32 %v553, %v611
    %v613 = vpop.f32.mrf.mxu0
    %v614 = vpop.f32.mrf.mxu0
    %v615 = vpop.f32.mrf.mxu0
    %616 = vdwg.mxu0
    %vm617 = vcmask 41984
    %618 = vst.msk [vmem:[#allocation3] sm:$0x3] %vm617, %v612
    // Predicated region
    $region30: #{tpu_custom_call.1} parent=1 // pred_check
      _
    $region31: #{tpu_custom_call.1} parent=1 // pred_check_branch
      %620 = sbr.rel (0) target = $region33
    $region32: #{tpu_custom_call.1} parent=1 // pred_region
      %s622 = ssub.s32 32, 32
      %623 = vsyncadd [#allocation4], %s622
      %s625 = sshll.u32 [#allocation3], 4
      %s626 = int_to_ptr.vmem [resolvable:$true] %s625
      %628 = dma.vmem_to_hbm [thread:$0]  %s626, 32, %s7, [#allocation4]
    $region33: #{tpu_custom_call.1} parent=1 // pred_fallthru
      _
    // Predicated region
    $region34: #{tpu_custom_call.1} parent=1 // pred_check
      _
    $region35: #{tpu_custom_call.1} parent=1 // pred_check_branch
      %630 = sbr.rel (0) target = $region37
    $region36: #{tpu_custom_call.1} parent=1 // pred_region
      %631 = dma.done [#allocation4], 32
    $region37: #{tpu_custom_call.1} parent=1 // pred_fallthru
      _
    %632 = vsyncpa [#allocation4], 1

</llo_original>
